<compile_context>
chip_gen: v6e
topology: v6e:2x2x1
jax: 0.10.0
libtpu: 0.0.40
codegen_flags: <defaults>
</compile_context>

<pallas_src>
import functools

import jax
import jax.numpy as jnp
from jax.experimental import pallas as pl
from jax.experimental.pallas import tpu as pltpu

_LANES = 128
_SUBLANES = 8
_MAX_TILE_ROWS = 1024      # 1024*128*4B = 512 KiB per buffer


def _gaussian_dropout_kernel(x_ref, noise_ref, o_ref, *, alpha):
    x = x_ref[...].astype(jnp.float32)
    n = noise_ref[...]
    o_ref[...] = (x + n * alpha).astype(o_ref.dtype)


def gaussian_dropout(x, alpha, seed, *, training=True):
    """x + N(0,1)*alpha in training mode; identity otherwise (matches torch)."""
    if not training or alpha == 0.0:
        # torch module's eval path: pure identity, no kernel launch needed.
        return x

    orig_shape, orig_dtype = x.shape, x.dtype
    n = x.size

    # Flatten to a lane-dense (rows, 128) slab, (8,128)-aligned, tiled in rows.
    rows = pl.cdiv(n, _LANES)
    rows = pl.cdiv(rows, _SUBLANES) * _SUBLANES
    tile_rows = min(_MAX_TILE_ROWS, rows)
    rows = pl.cdiv(rows, tile_rows) * tile_rows
    padded_n = rows * _LANES

    x_flat = jnp.ravel(x)
    if padded_n != n:
        x_flat = jnp.pad(x_flat, (0, padded_n - n))
    x2d = x_flat.reshape(rows, _LANES)

    # Deterministic standard-normal noise (same role as torch.randn_like).
    key = jax.random.PRNGKey(seed)
    noise2d = jax.random.normal(key, (rows, _LANES), jnp.float32)

    out2d = pl.pallas_call(
        functools.partial(_gaussian_dropout_kernel, alpha=float(alpha)),
        out_shape=jax.ShapeDtypeStruct((rows, _LANES), orig_dtype),
        grid=(rows // tile_rows,),
        in_specs=[pl.BlockSpec((tile_rows, _LANES), lambda i: (i, 0)),
                  pl.BlockSpec((tile_rows, _LANES), lambda i: (i, 0))],
        out_specs=pl.BlockSpec((tile_rows, _LANES), lambda i: (i, 0)),
        compiler_params=pltpu.CompilerParams(
            dimension_semantics=("parallel",)),
    )(x2d, noise2d)

    return out2d.reshape(-1)[:n].reshape(orig_shape)


if __name__ == "__main__":
    key = jax.random.PRNGKey(0)
    ALPHA = 0.5
    x = jax.random.normal(key, (2, 4, 16, 16), jnp.float32)

    # Training mode: additive Gaussian noise with std == alpha.
    y = jax.block_until_ready(gaussian_dropout(x, ALPHA, seed=0, training=True))
    assert y.shape == x.shape and y.dtype == x.dtype
    assert bool(jnp.all(jnp.isfinite(y)))

    noise = (y - x) / ALPHA                    # should be ~N(0, 1)
    assert abs(float(jnp.mean(noise))) < 0.1
    assert abs(float(jnp.std(noise)) - 1.0) < 0.15

    # Deterministic for a fixed seed.
    y2 = jax.block_until_ready(gaussian_dropout(x, ALPHA, seed=0, training=True))
    assert bool(jnp.array_equal(y, y2))

    # Eval mode is the identity (matches the PyTorch module's non-training path).
    y_eval = gaussian_dropout(x, ALPHA, seed=0, training=False)
    assert bool(jnp.array_equal(y_eval, x))

    print("KERNEL_OK")
</pallas_src>

<mosaic_0001>
module attributes {stable_mosaic.version = 11 : i64} {
  func.func @_gaussian_dropout_kernel(%arg0: i32, %arg1: memref<16x128xf32, #tpu.memory_space<vmem>>, %arg2: memref<16x128xf32, #tpu.memory_space<vmem>>, %arg3: memref<16x128xf32, #tpu.memory_space<vmem>>) attributes {dimension_semantics = [#tpu.dimension_semantics<parallel>], iteration_bounds = array<i64: 1>, scalar_prefetch = 0 : i64, scratch_operands = 0 : i64, tpu.core_type = #tpu.core_type<tc>, window_params = [{transform_indices = @transform_0, window_bounds = array<i64: 16, 128>}, {transform_indices = @transform_1, window_bounds = array<i64: 16, 128>}, {transform_indices = @transform_2, window_bounds = array<i64: 16, 128>}]} {
    %c0 = arith.constant 0 : index
    %c0_0 = arith.constant 0 : index
    %0 = vector.load %arg1[%c0, %c0_0] : memref<16x128xf32, #tpu.memory_space<vmem>>, vector<16x128xf32>
    %c0_1 = arith.constant 0 : index
    %c0_2 = arith.constant 0 : index
    %1 = vector.load %arg2[%c0_1, %c0_2] : memref<16x128xf32, #tpu.memory_space<vmem>>, vector<16x128xf32>
    %cst = arith.constant 5.000000e-01 : f32
    %2 = vector.broadcast %cst : f32 to vector<16x128xf32>
    %3 = arith.mulf %1, %2 : vector<16x128xf32>
    %4 = arith.addf %0, %3 : vector<16x128xf32>
    %c0_3 = arith.constant 0 : index
    %c0_4 = arith.constant 0 : index
    %5 = vector.load %arg3[%c0_3, %c0_4] : memref<16x128xf32, #tpu.memory_space<vmem>>, vector<16x128xf32>
    tpu.vector_store %arg3[%c0_3, %c0_4], %4 {strides = array<i32>} : memref<16x128xf32, #tpu.memory_space<vmem>>, vector<16x128xf32>,
    return
  }
  func.func @transform_0(%arg0: i32) -> (i32, i32) {
    %c0_i32 = arith.constant 0 : i32
    %c0_i32_0 = arith.constant 0 : i32
    return %arg0, %c0_i32 : i32, i32
  }
  func.func @transform_1(%arg0: i32) -> (i32, i32) {
    %c0_i32 = arith.constant 0 : i32
    %c0_i32_0 = arith.constant 0 : i32
    return %arg0, %c0_i32 : i32, i32
  }
  func.func @transform_2(%arg0: i32) -> (i32, i32) {
    %c0_i32 = arith.constant 0 : i32
    %c0_i32_0 = arith.constant 0 : i32
    return %arg0, %c0_i32 : i32, i32
  }
}

</mosaic_0001>

<llo_original>
// kernel: tpu_custom_call.1
$region0: #{tpu_custom_call.1}
  #allocation0 [shape = 'u32[]', space=smem, size = 0x4, offset = 0x4, fixed_abs, tag = 'smem constant byte address 0x4 - core index']
  #allocation1 [shape = 'u32[144,128]{1,0:T(1,128)}', space=vmem, size = 0x12000, scoped, tag = 'internal scratch']
  %s0 = inlined_call_operand.hbm [shape: f32[16,128], index: 0, kind: input, shape index: {}]
  %s1 = inlined_call_operand.hbm [shape: f32[16,128], index: 1, kind: input, shape index: {}]
  %s2 = inlined_call_operand.hbm [shape: f32[16,128], index: 2, kind: output, shape index: {}]
  %s3 = sld [smem:[#allocation0]]
  $region26: #{tpu_custom_call.1} parent=0
    _
  %s5 = ssub.s32 1, %s3
  %s6 = scalar_select 0, %s5, %s3
  $region1: #{tpu_custom_call.1} parent=0
    #allocation2 [shape = 'u8[8192]{0}', space=vmem, size = 0x2000, scoped, tag = 'input window, operand 0, single buffered']
    #allocation3 [shape = 's32[1]{0}', space=sflag, size = 0x4, scoped, tag = 'scoped memory for tpu_custom_call.1']
    #allocation4 [shape = 's32[1]{0}', space=sflag, size = 0x4, scoped, tag = 'scoped memory for tpu_custom_call.1']
    #allocation5 [shape = 'u8[8192]{0}', space=vmem, size = 0x2000, scoped, tag = 'input window, operand 1, single buffered']
    #allocation6 [shape = 's32[1]{0}', space=sflag, size = 0x4, scoped, tag = 'scoped memory for tpu_custom_call.1']
    #allocation7 [shape = 'u8[8192]{0}', space=vmem, size = 0x2000, scoped, tag = 'output window, operand 0, single buffered']
    %7 = vsyncpa [#allocation3], 0
    %8 = vsyncpa [#allocation6], 0
    %9 = vsyncpa [#allocation4], 0
    // Predicated region
    $region2: #{tpu_custom_call.1} parent=1 // pred_check
      _
    $region3: #{tpu_custom_call.1} parent=1 // pred_check_branch
      %11 = sbr.rel (0) target = $region5
    $region4: #{tpu_custom_call.1} parent=1 // pred_region
      %s13 = ssub.s32 256, 256
      %14 = vsyncadd [#allocation3], %s13
      %s15 = sshll.u32 [#allocation2], 4
      %s16 = int_to_ptr.vmem [resolvable:$true] %s15
      %21 = dma.hbm_to_vmem [thread:$0]  %s0, 256, %s16, [#allocation3], 128, 128, 8
    $region5: #{tpu_custom_call.1} parent=1 // pred_fallthru
      _
    // Predicated region
    $region6: #{tpu_custom_call.1} parent=1 // pred_check
      _
    $region7: #{tpu_custom_call.1} parent=1 // pred_check_branch
      %23 = sbr.rel (0) target = $region9
    $region8: #{tpu_custom_call.1} parent=1 // pred_region
      %s25 = ssub.s32 256, 256
      %26 = vsyncadd [#allocation6], %s25
      %s27 = sshll.u32 [#allocation5], 4
      %s28 = int_to_ptr.vmem [resolvable:$true] %s27
      %33 = dma.hbm_to_vmem [thread:$0]  %s1, 256, %s28, [#allocation6], 128, 128, 8
    $region9: #{tpu_custom_call.1} parent=1 // pred_fallthru
      _
    // Predicated region
    $region10: #{tpu_custom_call.1} parent=1 // pred_check
      _
    $region11: #{tpu_custom_call.1} parent=1 // pred_check_branch
      %35 = sbr.rel (0) target = $region13
    $region12: #{tpu_custom_call.1} parent=1 // pred_region
      %36 = dma.done [#allocation3], 256
    $region13: #{tpu_custom_call.1} parent=1 // pred_fallthru
      _
    // Predicated region
    $region14: #{tpu_custom_call.1} parent=1 // pred_check
      _
    $region15: #{tpu_custom_call.1} parent=1 // pred_check_branch
      %38 = sbr.rel (0) target = $region17
    $region16: #{tpu_custom_call.1} parent=1 // pred_region
      %39 = dma.done [#allocation6], 256
    $region17: #{tpu_custom_call.1} parent=1 // pred_fallthru
      _
    %v40 = vld [vmem:[#allocation2] sm:$0xff]
    %v41 = vld [vmem:[#allocation2 + $0x8] sm:$0xff]
    %v42 = vld [vmem:[#allocation5] sm:$0xff]
    %v43 = vld [vmem:[#allocation5 + $0x8] sm:$0xff]
    %v44 = vmul.f32 %v42, 0.5
    %v45 = vmul.f32 %v43, 0.5
    %v46 = vadd.f32 %v40, %v44
    %v47 = vadd.f32 %v41, %v45
    %48 = vst [vmem:[#allocation7] sm:$0xff] %v46
    %49 = vst [vmem:[#allocation7 + $0x8] sm:$0xff] %v47
    // Predicated region
    $region18: #{tpu_custom_call.1} parent=1 // pred_check
      _
    $region19: #{tpu_custom_call.1} parent=1 // pred_check_branch
      %51 = sbr.rel (0) target = $region21
    $region20: #{tpu_custom_call.1} parent=1 // pred_region
      %s53 = ssub.s32 256, 256
      %54 = vsyncadd [#allocation4], %s53
      %s55 = sshll.u32 [#allocation7], 4
      %s56 = int_to_ptr.vmem [resolvable:$true] %s55
      %61 = dma.vmem_to_hbm [thread:$0]  %s56, 256, %s2, [#allocation4], 128, 128, 8
    $region21: #{tpu_custom_call.1} parent=1 // pred_fallthru
      _
    // Predicated region
    $region22: #{tpu_custom_call.1} parent=1 // pred_check
      _
    $region23: #{tpu_custom_call.1} parent=1 // pred_check_branch
      %63 = sbr.rel (0) target = $region25
    $region24: #{tpu_custom_call.1} parent=1 // pred_region
      %64 = dma.done [#allocation4], 256
    $region25: #{tpu_custom_call.1} parent=1 // pred_fallthru
      _
    %65 = vsyncpa [#allocation3], 1
    %66 = vsyncpa [#allocation6], 1
    %67 = vsyncpa [#allocation4], 1

</llo_original>
